<compile_context>
chip_gen: v5e
topology: v5e:2x2
jax: 0.10.0
libtpu: 0.0.40
codegen_flags: <defaults>
</compile_context>

<pallas_src>
import math

import jax
import jax.numpy as jnp
from jax.experimental import pallas as pl
from jax.experimental.pallas import tpu as pltpu


def make_mha_kernel(num_heads, head_dim, compute_dtype):
    scale = 1.0 / math.sqrt(head_dim)

    def kernel(xq_ref, xk_ref, xv_ref, wqkv_ref, bias_ref, wm_ref, o_ref,
               q_s, k_s, v_s, ctx_s):
        # xq_ref: (d_model, tq); xk_ref / xv_ref: (d_model, N)   [compute_dtype]
        # wqkv_ref: (3, d_model, d_model) [compute_dtype], head-major permuted rows
        # bias_ref: (d_model, 4) f32  -- cols: bq, bk, bv (permuted), bm (natural)
        # wm_ref: (d_model, d_model) [compute_dtype], head-major permuted columns
        bias = bias_ref[...]                                            # (d_model, 4) f32

        # --- fused full-width projections: one (d,d)x(d,·) MXU matmul per Q/K/V ---
        q_s[...] = jnp.dot(wqkv_ref[0], xq_ref[...],
                           preferred_element_type=jnp.float32) + bias[:, 0:1]
        k_s[...] = jnp.dot(wqkv_ref[1], xk_ref[...],
                           preferred_element_type=jnp.float32) + bias[:, 1:2]
        v_s[...] = jnp.dot(wqkv_ref[2], xv_ref[...],
                           preferred_element_type=jnp.float32) + bias[:, 2:3]

        # --- per-head attention; head outputs gathered head-major into ctx_s ---
        for h in range(num_heads):              # static unroll; live ranges bounded by refs
            lo = h * head_dim
            hi = lo + head_dim
            qh = q_s[lo:hi, :].astype(compute_dtype)                    # (hd, tq)
            kh = k_s[lo:hi, :].astype(compute_dtype)                    # (hd, N)
            vh = v_s[lo:hi, :].astype(compute_dtype)                    # (hd, N)

            # scores[n, m] = sum_d qh[d, n] * kh[d, m]
            s = jax.lax.dot_general(qh, kh, (((0,), (0,)), ((), ())),
                                    preferred_element_type=jnp.float32) * scale   # (tq, N)
            s = s - jnp.max(s, axis=-1, keepdims=True)                  # f32 softmax
            p = jnp.exp(s)
            p = p * pl.reciprocal(jnp.sum(p, axis=-1, keepdims=True), approx=True)

            # xh[d, n] = sum_m vh[d, m] * p[n, m]
            ctx_s[lo:hi, :] = jax.lax.dot_general(
                vh, p.astype(compute_dtype), (((1,), (1,)), ((), ())),
                preferred_element_type=jnp.float32)                     # (hd, tq)

        # --- single full-width merge matmul + merge bias ---
        out = jnp.dot(wm_ref[...], ctx_s[...].astype(compute_dtype),
                      preferred_element_type=jnp.float32) + bias[:, 3:4]
        o_ref[...] = out.astype(o_ref.dtype)

    return kernel


def _pick_q_tile(n):
    """Largest lane-dense (multiple of 128) query tile dividing N, else the whole N."""
    for t in (512, 256, 128):
        if n >= t and n % t == 0:
            return t
    return n


def multi_head_attention(q, k, v, params, num_heads, compute_dtype=jnp.bfloat16):
    B, d_model, N = q.shape
    assert d_model % num_heads == 0, "d_model must be divisible by num_heads"
    head_dim = d_model // num_heads

    # ---- plain-JAX glue: head-major channel permutation matching PyTorch's
    #      .view(B, head_dim, num_heads, N) ordering: channel c = d*H + h  ->  h*head_dim + d
    perm = jnp.arange(d_model).reshape(head_dim, num_heads).T.reshape(-1)

    wqkv = jnp.stack([params["wq"][perm, :],
                      params["wk"][perm, :],
                      params["wv"][perm, :]], axis=0).astype(compute_dtype)      # (3, d, d)
    wm = params["wm"][:, perm].astype(compute_dtype)                              # (d, d)
    bias = jnp.stack([params["bq"][perm], params["bk"][perm],
                      params["bv"][perm], params["bm"]], axis=1).astype(jnp.float32)  # (d, 4)

    qb = q.astype(compute_dtype)
    kb = k.astype(compute_dtype)
    vb = v.astype(compute_dtype)

    tq = _pick_q_tile(N)
    n_q = N // tq

    kernel = make_mha_kernel(num_heads, head_dim, compute_dtype)

    q_spec = pl.BlockSpec((pl.Squeezed(), d_model, tq), lambda b, i: (b, 0, i))
    kv_spec = pl.BlockSpec((pl.Squeezed(), d_model, N), lambda b, i: (b, 0, 0))
    out_spec = pl.BlockSpec((pl.Squeezed(), d_model, tq), lambda b, i: (b, 0, i))

    return pl.pallas_call(
        kernel,
        out_shape=jax.ShapeDtypeStruct((B, d_model, N), q.dtype),
        grid=(B, n_q),
        in_specs=[q_spec, kv_spec, kv_spec,
                  pl.BlockSpec((3, d_model, d_model), lambda b, i: (0, 0, 0)),
                  pl.BlockSpec((d_model, 4), lambda b, i: (0, 0)),
                  pl.BlockSpec((d_model, d_model), lambda b, i: (0, 0))],
        out_specs=out_spec,
        scratch_shapes=[pltpu.VMEM((d_model, tq), jnp.float32),   # q projection
                        pltpu.VMEM((d_model, N), jnp.float32),    # k projection
                        pltpu.VMEM((d_model, N), jnp.float32),    # v projection
                        pltpu.VMEM((d_model, tq), jnp.float32)],  # head-major context
        compiler_params=pltpu.CompilerParams(
            dimension_semantics=("parallel", "parallel"),
            vmem_limit_bytes=48 * 1024 * 1024),                   # headroom on v7x's 64 MiB
    )(qb, kb, vb, wqkv, bias, wm)


def reference(q, k, v, params, num_heads):
    """Pure-JAX f32 reference mirroring the PyTorch module exactly."""
    B, d_model, N = q.shape
    head_dim = d_model // num_heads

    def conv1x1(w, b, x):
        return jnp.einsum("oi,bin->bon", w, x) + b[None, :, None]

    Q = conv1x1(params["wq"], params["bq"], q).reshape(B, head_dim, num_heads, N)
    K = conv1x1(params["wk"], params["bk"], k).reshape(B, head_dim, num_heads, N)
    V = conv1x1(params["wv"], params["bv"], v).reshape(B, head_dim, num_heads, N)
    scores = jnp.einsum("bdhn,bdhm->bhnm", Q, K) / math.sqrt(head_dim)
    prob = jax.nn.softmax(scores, axis=-1)
    x = jnp.einsum("bhnm,bdhm->bdhn", prob, V)
    x = x.reshape(B, d_model, N)
    return conv1x1(params["wm"], params["bm"], x)


if __name__ == "__main__":
    B, d_model, num_heads, N = 2, 32, 4, 16

    key = jax.random.PRNGKey(0)
    keys = jax.random.split(key, 11)
    bound = 1.0 / math.sqrt(d_model)  # PyTorch Conv1d default init scale

    def u(kk, shape):
        return jax.random.uniform(kk, shape, jnp.float32, -bound, bound)

    params = {
        "wq": u(keys[0], (d_model, d_model)), "bq": u(keys[1], (d_model,)),
        "wk": u(keys[2], (d_model, d_model)), "bk": u(keys[3], (d_model,)),
        "wv": u(keys[4], (d_model, d_model)), "bv": u(keys[5], (d_model,)),
        "wm": u(keys[6], (d_model, d_model)), "bm": u(keys[7], (d_model,)),
    }

    q = jax.random.normal(keys[8], (B, d_model, N), jnp.float32)
    k = jax.random.normal(keys[9], (B, d_model, N), jnp.float32)
    v = jax.random.normal(keys[10], (B, d_model, N), jnp.float32)

    ref = reference(q, k, v, params, num_heads)

    # f32 compute path: tight check of the kernel structure.
    out_f32 = jax.block_until_ready(
        multi_head_attention(q, k, v, params, num_heads, compute_dtype=jnp.float32))
    assert out_f32.shape == (B, d_model, N)
    assert jnp.allclose(out_f32, ref, rtol=2e-3, atol=2e-3), "f32 kernel mismatch vs reference"

    # bf16 MXU path (default): looser tolerance for bf16 operand rounding.
    out_bf16 = jax.block_until_ready(
        multi_head_attention(q, k, v, params, num_heads, compute_dtype=jnp.bfloat16))
    assert out_bf16.shape == (B, d_model, N)
    assert jnp.allclose(out_bf16, ref, rtol=5e-2, atol=5e-2), "bf16 kernel mismatch vs reference"

    print("KERNEL_OK")
</pallas_src>

<mosaic_0001>
module attributes {stable_mosaic.version = 11 : i64} {
  func.func @kernel(%arg0: i32, %arg1: i32, %arg2: memref<1x32x16xf32, #tpu.memory_space<vmem>>, %arg3: memref<1x32x16xf32, #tpu.memory_space<vmem>>, %arg4: memref<1x32x16xf32, #tpu.memory_space<vmem>>, %arg5: memref<3x32x32xf32, #tpu.memory_space<vmem>>, %arg6: memref<32x4xf32, #tpu.memory_space<vmem>>, %arg7: memref<32x32xf32, #tpu.memory_space<vmem>>, %arg8: memref<1x32x16xf32, #tpu.memory_space<vmem>>, %arg9: memref<32x16xf32, #tpu.memory_space<vmem>>, %arg10: memref<32x16xf32, #tpu.memory_space<vmem>>, %arg11: memref<32x16xf32, #tpu.memory_space<vmem>>, %arg12: memref<32x16xf32, #tpu.memory_space<vmem>>) attributes {dimension_semantics = [#tpu.dimension_semantics<parallel>, #tpu.dimension_semantics<parallel>], iteration_bounds = array<i64: 2, 1>, scalar_prefetch = 0 : i64, scratch_operands = 4 : i64, tpu.core_type = #tpu.core_type<tc>, window_params = [{transform_indices = @transform_0, window_bounds = array<i64: 1, 32, 16>}, {transform_indices = @transform_1, window_bounds = array<i64: 1, 32, 16>}, {transform_indices = @transform_2, window_bounds = array<i64: 1, 32, 16>}, {pipeline_mode = #tpu.pipeline_mode<synchronous>, transform_indices = @transform_3, window_bounds = array<i64: 3, 32, 32>}, {pipeline_mode = #tpu.pipeline_mode<synchronous>, transform_indices = @transform_4, window_bounds = array<i64: 32, 4>}, {pipeline_mode = #tpu.pipeline_mode<synchronous>, transform_indices = @transform_5, window_bounds = array<i64: 32, 32>}, {transform_indices = @transform_6, window_bounds = array<i64: 1, 32, 16>}]} {
    %c0 = arith.constant 0 : index
    %c0_0 = arith.constant 0 : index
    %0 = vector.load %arg6[%c0, %c0_0] : memref<32x4xf32, #tpu.memory_space<vmem>>, vector<32x4xf32>
    %c0_1 = arith.constant 0 : index
    %c0_2 = arith.constant 0 : index
    %c0_3 = arith.constant 0 : index
    %1 = vector.load %arg5[%c0_1, %c0_2, %c0_3] : memref<3x32x32xf32, #tpu.memory_space<vmem>>, vector<1x32x32xf32>
    %2 = vector.shape_cast %1 : vector<1x32x32xf32> to vector<32x32xf32>
    %c0_4 = arith.constant 0 : index
    %c0_5 = arith.constant 0 : index
    %c0_6 = arith.constant 0 : index
    %3 = vector.load %arg2[%c0_4, %c0_5, %c0_6] : memref<1x32x16xf32, #tpu.memory_space<vmem>>, vector<1x32x16xf32>
    %4 = vector.shape_cast %3 : vector<1x32x16xf32> to vector<32x16xf32>
    %cst = arith.constant dense<0.000000e+00> : vector<32x16xf32>
    %5 = tpu.matmul %2, %4, %cst {dimension_numbers = #tpu.dot_dimension_numbers<[1], [0], [0], [1], [0, 0, 1, 1], [], []>} : vector<32x32xf32>, vector<32x16xf32>, vector<32x16xf32> -> vector<32x16xf32>
    %6 = vector.extract_strided_slice %0 {offsets = [0, 0], sizes = [32, 1], strides = [1, 1]} : vector<32x4xf32> to vector<32x1xf32>
    %7 = vector.broadcast %6 : vector<32x1xf32> to vector<32x16xf32>
    %8 = arith.addf %5, %7 : vector<32x16xf32>
    %c0_7 = arith.constant 0 : index
    %c0_8 = arith.constant 0 : index
    %9 = vector.load %arg9[%c0_7, %c0_8] : memref<32x16xf32, #tpu.memory_space<vmem>>, vector<32x16xf32>
    tpu.vector_store %arg9[%c0_7, %c0_8], %8 {strides = array<i32>} : memref<32x16xf32, #tpu.memory_space<vmem>>, vector<32x16xf32>,
    %c1 = arith.constant 1 : index
    %c0_9 = arith.constant 0 : index
    %c0_10 = arith.constant 0 : index
    %10 = vector.load %arg5[%c1, %c0_9, %c0_10] : memref<3x32x32xf32, #tpu.memory_space<vmem>>, vector<1x32x32xf32>
    %11 = vector.shape_cast %10 : vector<1x32x32xf32> to vector<32x32xf32>
    %c0_11 = arith.constant 0 : index
    %c0_12 = arith.constant 0 : index
    %c0_13 = arith.constant 0 : index
    %12 = vector.load %arg3[%c0_11, %c0_12, %c0_13] : memref<1x32x16xf32, #tpu.memory_space<vmem>>, vector<1x32x16xf32>
    %13 = vector.shape_cast %12 : vector<1x32x16xf32> to vector<32x16xf32>
    %cst_14 = arith.constant dense<0.000000e+00> : vector<32x16xf32>
    %14 = tpu.matmul %11, %13, %cst_14 {dimension_numbers = #tpu.dot_dimension_numbers<[1], [0], [0], [1], [0, 0, 1, 1], [], []>} : vector<32x32xf32>, vector<32x16xf32>, vector<32x16xf32> -> vector<32x16xf32>
    %15 = vector.extract_strided_slice %0 {offsets = [0, 1], sizes = [32, 1], strides = [1, 1]} : vector<32x4xf32> to vector<32x1xf32>
    %16 = vector.broadcast %15 : vector<32x1xf32> to vector<32x16xf32>
    %17 = arith.addf %14, %16 : vector<32x16xf32>
    %c0_15 = arith.constant 0 : index
    %c0_16 = arith.constant 0 : index
    %18 = vector.load %arg10[%c0_15, %c0_16] : memref<32x16xf32, #tpu.memory_space<vmem>>, vector<32x16xf32>
    tpu.vector_store %arg10[%c0_15, %c0_16], %17 {strides = array<i32>} : memref<32x16xf32, #tpu.memory_space<vmem>>, vector<32x16xf32>,
    %c2 = arith.constant 2 : index
    %c0_17 = arith.constant 0 : index
    %c0_18 = arith.constant 0 : index
    %19 = vector.load %arg5[%c2, %c0_17, %c0_18] : memref<3x32x32xf32, #tpu.memory_space<vmem>>, vector<1x32x32xf32>
    %20 = vector.shape_cast %19 : vector<1x32x32xf32> to vector<32x32xf32>
    %c0_19 = arith.constant 0 : index
    %c0_20 = arith.constant 0 : index
    %c0_21 = arith.constant 0 : index
    %21 = vector.load %arg4[%c0_19, %c0_20, %c0_21] : memref<1x32x16xf32, #tpu.memory_space<vmem>>, vector<1x32x16xf32>
    %22 = vector.shape_cast %21 : vector<1x32x16xf32> to vector<32x16xf32>
    %cst_22 = arith.constant dense<0.000000e+00> : vector<32x16xf32>
    %23 = tpu.matmul %20, %22, %cst_22 {dimension_numbers = #tpu.dot_dimension_numbers<[1], [0], [0], [1], [0, 0, 1, 1], [], []>} : vector<32x32xf32>, vector<32x16xf32>, vector<32x16xf32> -> vector<32x16xf32>
    %24 = vector.extract_strided_slice %0 {offsets = [0, 2], sizes = [32, 1], strides = [1, 1]} : vector<32x4xf32> to vector<32x1xf32>
    %25 = vector.broadcast %24 : vector<32x1xf32> to vector<32x16xf32>
    %26 = arith.addf %23, %25 : vector<32x16xf32>
    %c0_23 = arith.constant 0 : index
    %c0_24 = arith.constant 0 : index
    %27 = vector.load %arg11[%c0_23, %c0_24] : memref<32x16xf32, #tpu.memory_space<vmem>>, vector<32x16xf32>
    tpu.vector_store %arg11[%c0_23, %c0_24], %26 {strides = array<i32>} : memref<32x16xf32, #tpu.memory_space<vmem>>, vector<32x16xf32>,
    %c0_25 = arith.constant 0 : index
    %c0_26 = arith.constant 0 : index
    %28 = vector.load %arg9[%c0_25, %c0_26] : memref<32x16xf32, #tpu.memory_space<vmem>>, vector<8x16xf32>
    %c0_27 = arith.constant 0 : index
    %c0_28 = arith.constant 0 : index
    %29 = vector.load %arg10[%c0_27, %c0_28] : memref<32x16xf32, #tpu.memory_space<vmem>>, vector<8x16xf32>
    %c0_29 = arith.constant 0 : index
    %c0_30 = arith.constant 0 : index
    %30 = vector.load %arg11[%c0_29, %c0_30] : memref<32x16xf32, #tpu.memory_space<vmem>>, vector<8x16xf32>
    %cst_31 = arith.constant dense<0.000000e+00> : vector<16x16xf32>
    %31 = tpu.matmul %28, %29, %cst_31 {dimension_numbers = #tpu.dot_dimension_numbers<[0], [0], [1], [1], [0, 1, 1, 1], [], []>} : vector<8x16xf32>, vector<8x16xf32>, vector<16x16xf32> -> vector<16x16xf32>
    %cst_32 = arith.constant 0.353553385 : f32
    %32 = vector.broadcast %cst_32 : f32 to vector<16x16xf32>
    %33 = arith.mulf %31, %32 : vector<16x16xf32>
    %cst_33 = arith.constant dense<0xFF800000> : vector<16xf32>
    %34 = vector.multi_reduction <maximumf>, %33, %cst_33 [1] : vector<16x16xf32> to vector<16xf32>
    %35 = vector.shape_cast %34 : vector<16xf32> to vector<16x1xf32>
    %36 = vector.broadcast %35 : vector<16x1xf32> to vector<16x16xf32>
    %37 = arith.subf %33, %36 : vector<16x16xf32>
    %38 = math.exp %37 : vector<16x16xf32>
    %cst_34 = arith.constant dense<0.000000e+00> : vector<16xf32>
    %39 = vector.multi_reduction <add>, %38, %cst_34 [1] : vector<16x16xf32> to vector<16xf32>
    %40 = vector.shape_cast %39 : vector<16xf32> to vector<16x1xf32>
    %41 = tpu.reciprocal %40 {approx = true} : vector<16x1xf32> -> vector<16x1xf32>
    %42 = vector.broadcast %41 : vector<16x1xf32> to vector<16x16xf32>
    %43 = arith.mulf %38, %42 : vector<16x16xf32>
    %cst_35 = arith.constant dense<0.000000e+00> : vector<8x16xf32>
    %44 = tpu.matmul %30, %43, %cst_35 {dimension_numbers = #tpu.dot_dimension_numbers<[1], [1], [0], [0], [0, 0, 1, 0], [], []>} : vector<8x16xf32>, vector<16x16xf32>, vector<8x16xf32> -> vector<8x16xf32>
    %c0_36 = arith.constant 0 : index
    %c0_37 = arith.constant 0 : index
    %45 = vector.load %arg12[%c0_36, %c0_37] : memref<32x16xf32, #tpu.memory_space<vmem>>, vector<8x16xf32>
    tpu.vector_store %arg12[%c0_36, %c0_37], %44 {strides = array<i32>} : memref<32x16xf32, #tpu.memory_space<vmem>>, vector<8x16xf32>,
    %c8 = arith.constant 8 : index
    %c0_38 = arith.constant 0 : index
    %46 = vector.load %arg9[%c8, %c0_38] : memref<32x16xf32, #tpu.memory_space<vmem>>, vector<8x16xf32>
    %c8_39 = arith.constant 8 : index
    %c0_40 = arith.constant 0 : index
    %47 = vector.load %arg10[%c8_39, %c0_40] : memref<32x16xf32, #tpu.memory_space<vmem>>, vector<8x16xf32>
    %c8_41 = arith.constant 8 : index
    %c0_42 = arith.constant 0 : index
    %48 = vector.load %arg11[%c8_41, %c0_42] : memref<32x16xf32, #tpu.memory_space<vmem>>, vector<8x16xf32>
    %cst_43 = arith.constant dense<0.000000e+00> : vector<16x16xf32>
    %49 = tpu.matmul %46, %47, %cst_43 {dimension_numbers = #tpu.dot_dimension_numbers<[0], [0], [1], [1], [0, 1, 1, 1], [], []>} : vector<8x16xf32>, vector<8x16xf32>, vector<16x16xf32> -> vector<16x16xf32>
    %cst_44 = arith.constant 0.353553385 : f32
    %50 = vector.broadcast %cst_44 : f32 to vector<16x16xf32>
    %51 = arith.mulf %49, %50 : vector<16x16xf32>
    %cst_45 = arith.constant dense<0xFF800000> : vector<16xf32>
    %52 = vector.multi_reduction <maximumf>, %51, %cst_45 [1] : vector<16x16xf32> to vector<16xf32>
    %53 = vector.shape_cast %52 : vector<16xf32> to vector<16x1xf32>
    %54 = vector.broadcast %53 : vector<16x1xf32> to vector<16x16xf32>
    %55 = arith.subf %51, %54 : vector<16x16xf32>
    %56 = math.exp %55 : vector<16x16xf32>
    %cst_46 = arith.constant dense<0.000000e+00> : vector<16xf32>
    %57 = vector.multi_reduction <add>, %56, %cst_46 [1] : vector<16x16xf32> to vector<16xf32>
    %58 = vector.shape_cast %57 : vector<16xf32> to vector<16x1xf32>
    %59 = tpu.reciprocal %58 {approx = true} : vector<16x1xf32> -> vector<16x1xf32>
    %60 = vector.broadcast %59 : vector<16x1xf32> to vector<16x16xf32>
    %61 = arith.mulf %56, %60 : vector<16x16xf32>
    %cst_47 = arith.constant dense<0.000000e+00> : vector<8x16xf32>
    %62 = tpu.matmul %48, %61, %cst_47 {dimension_numbers = #tpu.dot_dimension_numbers<[1], [1], [0], [0], [0, 0, 1, 0], [], []>} : vector<8x16xf32>, vector<16x16xf32>, vector<8x16xf32> -> vector<8x16xf32>
    %c8_48 = arith.constant 8 : index
    %c0_49 = arith.constant 0 : index
    %63 = vector.load %arg12[%c8_48, %c0_49] : memref<32x16xf32, #tpu.memory_space<vmem>>, vector<8x16xf32>
    tpu.vector_store %arg12[%c8_48, %c0_49], %62 {strides = array<i32>} : memref<32x16xf32, #tpu.memory_space<vmem>>, vector<8x16xf32>,
    %c16 = arith.constant 16 : index
    %c0_50 = arith.constant 0 : index
    %64 = vector.load %arg9[%c16, %c0_50] : memref<32x16xf32, #tpu.memory_space<vmem>>, vector<8x16xf32>
    %c16_51 = arith.constant 16 : index
    %c0_52 = arith.constant 0 : index
    %65 = vector.load %arg10[%c16_51, %c0_52] : memref<32x16xf32, #tpu.memory_space<vmem>>, vector<8x16xf32>
    %c16_53 = arith.constant 16 : index
    %c0_54 = arith.constant 0 : index
    %66 = vector.load %arg11[%c16_53, %c0_54] : memref<32x16xf32, #tpu.memory_space<vmem>>, vector<8x16xf32>
    %cst_55 = arith.constant dense<0.000000e+00> : vector<16x16xf32>
    %67 = tpu.matmul %64, %65, %cst_55 {dimension_numbers = #tpu.dot_dimension_numbers<[0], [0], [1], [1], [0, 1, 1, 1], [], []>} : vector<8x16xf32>, vector<8x16xf32>, vector<16x16xf32> -> vector<16x16xf32>
    %cst_56 = arith.constant 0.353553385 : f32
    %68 = vector.broadcast %cst_56 : f32 to vector<16x16xf32>
    %69 = arith.mulf %67, %68 : vector<16x16xf32>
    %cst_57 = arith.constant dense<0xFF800000> : vector<16xf32>
    %70 = vector.multi_reduction <maximumf>, %69, %cst_57 [1] : vector<16x16xf32> to vector<16xf32>
    %71 = vector.shape_cast %70 : vector<16xf32> to vector<16x1xf32>
    %72 = vector.broadcast %71 : vector<16x1xf32> to vector<16x16xf32>
    %73 = arith.subf %69, %72 : vector<16x16xf32>
    %74 = math.exp %73 : vector<16x16xf32>
    %cst_58 = arith.constant dense<0.000000e+00> : vector<16xf32>
    %75 = vector.multi_reduction <add>, %74, %cst_58 [1] : vector<16x16xf32> to vector<16xf32>
    %76 = vector.shape_cast %75 : vector<16xf32> to vector<16x1xf32>
    %77 = tpu.reciprocal %76 {approx = true} : vector<16x1xf32> -> vector<16x1xf32>
    %78 = vector.broadcast %77 : vector<16x1xf32> to vector<16x16xf32>
    %79 = arith.mulf %74, %78 : vector<16x16xf32>
    %cst_59 = arith.constant dense<0.000000e+00> : vector<8x16xf32>
    %80 = tpu.matmul %66, %79, %cst_59 {dimension_numbers = #tpu.dot_dimension_numbers<[1], [1], [0], [0], [0, 0, 1, 0], [], []>} : vector<8x16xf32>, vector<16x16xf32>, vector<8x16xf32> -> vector<8x16xf32>
    %c16_60 = arith.constant 16 : index
    %c0_61 = arith.constant 0 : index
    %81 = vector.load %arg12[%c16_60, %c0_61] : memref<32x16xf32, #tpu.memory_space<vmem>>, vector<8x16xf32>
    tpu.vector_store %arg12[%c16_60, %c0_61], %80 {strides = array<i32>} : memref<32x16xf32, #tpu.memory_space<vmem>>, vector<8x16xf32>,
    %c24 = arith.constant 24 : index
    %c0_62 = arith.constant 0 : index
    %82 = vector.load %arg9[%c24, %c0_62] : memref<32x16xf32, #tpu.memory_space<vmem>>, vector<8x16xf32>
    %c24_63 = arith.constant 24 : index
    %c0_64 = arith.constant 0 : index
    %83 = vector.load %arg10[%c24_63, %c0_64] : memref<32x16xf32, #tpu.memory_space<vmem>>, vector<8x16xf32>
    %c24_65 = arith.constant 24 : index
    %c0_66 = arith.constant 0 : index
    %84 = vector.load %arg11[%c24_65, %c0_66] : memref<32x16xf32, #tpu.memory_space<vmem>>, vector<8x16xf32>
    %cst_67 = arith.constant dense<0.000000e+00> : vector<16x16xf32>
    %85 = tpu.matmul %82, %83, %cst_67 {dimension_numbers = #tpu.dot_dimension_numbers<[0], [0], [1], [1], [0, 1, 1, 1], [], []>} : vector<8x16xf32>, vector<8x16xf32>, vector<16x16xf32> -> vector<16x16xf32>
    %cst_68 = arith.constant 0.353553385 : f32
    %86 = vector.broadcast %cst_68 : f32 to vector<16x16xf32>
    %87 = arith.mulf %85, %86 : vector<16x16xf32>
    %cst_69 = arith.constant dense<0xFF800000> : vector<16xf32>
    %88 = vector.multi_reduction <maximumf>, %87, %cst_69 [1] : vector<16x16xf32> to vector<16xf32>
    %89 = vector.shape_cast %88 : vector<16xf32> to vector<16x1xf32>
    %90 = vector.broadcast %89 : vector<16x1xf32> to vector<16x16xf32>
    %91 = arith.subf %87, %90 : vector<16x16xf32>
    %92 = math.exp %91 : vector<16x16xf32>
    %cst_70 = arith.constant dense<0.000000e+00> : vector<16xf32>
    %93 = vector.multi_reduction <add>, %92, %cst_70 [1] : vector<16x16xf32> to vector<16xf32>
    %94 = vector.shape_cast %93 : vector<16xf32> to vector<16x1xf32>
    %95 = tpu.reciprocal %94 {approx = true} : vector<16x1xf32> -> vector<16x1xf32>
    %96 = vector.broadcast %95 : vector<16x1xf32> to vector<16x16xf32>
    %97 = arith.mulf %92, %96 : vector<16x16xf32>
    %cst_71 = arith.constant dense<0.000000e+00> : vector<8x16xf32>
    %98 = tpu.matmul %84, %97, %cst_71 {dimension_numbers = #tpu.dot_dimension_numbers<[1], [1], [0], [0], [0, 0, 1, 0], [], []>} : vector<8x16xf32>, vector<16x16xf32>, vector<8x16xf32> -> vector<8x16xf32>
    %c24_72 = arith.constant 24 : index
    %c0_73 = arith.constant 0 : index
    %99 = vector.load %arg12[%c24_72, %c0_73] : memref<32x16xf32, #tpu.memory_space<vmem>>, vector<8x16xf32>
    tpu.vector_store %arg12[%c24_72, %c0_73], %98 {strides = array<i32>} : memref<32x16xf32, #tpu.memory_space<vmem>>, vector<8x16xf32>,
    %c0_74 = arith.constant 0 : index
    %c0_75 = arith.constant 0 : index
    %100 = vector.load %arg7[%c0_74, %c0_75] : memref<32x32xf32, #tpu.memory_space<vmem>>, vector<32x32xf32>
    %c0_76 = arith.constant 0 : index
    %c0_77 = arith.constant 0 : index
    %101 = vector.load %arg12[%c0_76, %c0_77] : memref<32x16xf32, #tpu.memory_space<vmem>>, vector<32x16xf32>
    %cst_78 = arith.constant dense<0.000000e+00> : vector<32x16xf32>
    %102 = tpu.matmul %100, %101, %cst_78 {dimension_numbers = #tpu.dot_dimension_numbers<[1], [0], [0], [1], [0, 0, 1, 1], [], []>} : vector<32x32xf32>, vector<32x16xf32>, vector<32x16xf32> -> vector<32x16xf32>
    %103 = vector.extract_strided_slice %0 {offsets = [0, 3], sizes = [32, 1], strides = [1, 1]} : vector<32x4xf32> to vector<32x1xf32>
    %104 = vector.broadcast %103 : vector<32x1xf32> to vector<32x16xf32>
    %105 = arith.addf %102, %104 : vector<32x16xf32>
    %c0_79 = arith.constant 0 : index
    %c0_80 = arith.constant 0 : index
    %c0_81 = arith.constant 0 : index
    %106 = vector.load %arg8[%c0_79, %c0_80, %c0_81] : memref<1x32x16xf32, #tpu.memory_space<vmem>>, vector<1x32x16xf32>
    %107 = vector.shape_cast %106 : vector<1x32x16xf32> to vector<32x16xf32>
    %108 = vector.shape_cast %105 : vector<32x16xf32> to vector<1x32x16xf32>
    tpu.vector_store %arg8[%c0_79, %c0_80, %c0_81], %108 {strides = array<i32>} : memref<1x32x16xf32, #tpu.memory_space<vmem>>, vector<1x32x16xf32>,
    return
  }
  func.func @transform_0(%arg0: i32, %arg1: i32) -> (i32, i32, i32) {
    %c0_i32 = arith.constant 0 : i32
    %c0_i32_0 = arith.constant 0 : i32
    return %arg0, %c0_i32, %arg1 : i32, i32, i32
  }
  func.func @transform_1(%arg0: i32, %arg1: i32) -> (i32, i32, i32) {
    %c0_i32 = arith.constant 0 : i32
    %c0_i32_0 = arith.constant 0 : i32
    %c0_i32_1 = arith.constant 0 : i32
    return %arg0, %c0_i32, %c0_i32_0 : i32, i32, i32
  }
  func.func @transform_2(%arg0: i32, %arg1: i32) -> (i32, i32, i32) {
    %c0_i32 = arith.constant 0 : i32
    %c0_i32_0 = arith.constant 0 : i32
    %c0_i32_1 = arith.constant 0 : i32
    return %arg0, %c0_i32, %c0_i32_0 : i32, i32, i32
  }
  func.func @transform_3(%arg0: i32, %arg1: i32) -> (i32, i32, i32) {
    %c0_i32 = arith.constant 0 : i32
    %c0_i32_0 = arith.constant 0 : i32
    %c0_i32_1 = arith.constant 0 : i32
    %c0_i32_2 = arith.constant 0 : i32
    return %c0_i32, %c0_i32_0, %c0_i32_1 : i32, i32, i32
  }
  func.func @transform_4(%arg0: i32, %arg1: i32) -> (i32, i32) {
    %c0_i32 = arith.constant 0 : i32
    %c0_i32_0 = arith.constant 0 : i32
    %c0_i32_1 = arith.constant 0 : i32
    return %c0_i32, %c0_i32_0 : i32, i32
  }
  func.func @transform_5(%arg0: i32, %arg1: i32) -> (i32, i32) {
    %c0_i32 = arith.constant 0 : i32
    %c0_i32_0 = arith.constant 0 : i32
    %c0_i32_1 = arith.constant 0 : i32
    return %c0_i32, %c0_i32_0 : i32, i32
  }
  func.func @transform_6(%arg0: i32, %arg1: i32) -> (i32, i32, i32) {
    %c0_i32 = arith.constant 0 : i32
    %c0_i32_0 = arith.constant 0 : i32
    return %arg0, %c0_i32, %arg1 : i32, i32, i32
  }
}

</mosaic_0001>

<llo_original>
// kernel: tpu_custom_call.1
$region0: #{tpu_custom_call.1}
  #allocation0 [shape = 'u32[]', space=smem, size = 0x4, offset = 0x4, fixed_abs, tag = 'smem constant byte address 0x4 - core index']
  #allocation1 [shape = 'u32[72,128]{1,0:T(1,128)}', space=vmem, size = 0x9000, scoped, tag = 'internal scratch']
  #allocation2 [shape = 'f32[32,16]{1,0:T(8,128)}', space=vmem, size = 0x4000, scoped, tag = 'scratch operand']
  #allocation3 [shape = 'f32[32,16]{1,0:T(8,128)}', space=vmem, size = 0x4000, scoped, tag = 'scratch operand']
  #allocation4 [shape = 'f32[32,16]{1,0:T(8,128)}', space=vmem, size = 0x4000, scoped, tag = 'scratch operand']
  #allocation5 [shape = 'f32[32,16]{1,0:T(8,128)}', space=vmem, size = 0x4000, scoped, tag = 'scratch operand']
  %s0 = inlined_call_operand.vmem [shape: f32[2,32,16], index: 0, kind: input, shape index: {}]
  %s1 = inlined_call_operand.vmem [shape: f32[2,32,16], index: 1, kind: input, shape index: {}]
  %s2 = inlined_call_operand.vmem [shape: f32[2,32,16], index: 2, kind: input, shape index: {}]
  %s3 = inlined_call_operand.vmem [shape: f32[3,32,32], index: 3, kind: input, shape index: {}]
  %s4 = inlined_call_operand.vmem [shape: f32[32,4], index: 4, kind: input, shape index: {}]
  %s5 = inlined_call_operand.vmem [shape: f32[32,32], index: 5, kind: input, shape index: {}]
  %s6 = inlined_call_operand.vmem [shape: f32[2,32,16], index: 6, kind: output, shape index: {}]
  %s7 = sld [smem:[#allocation0]]
  $region57: #{tpu_custom_call.1} parent=0
    _
  %s9 = ssub.s32 1, %s7
  %s10 = scalar_select 0, %s9, %s7
  loop: start=0, step=1, limit=4
  $region2: #{tpu_custom_call.1} parent=0 // loop_pre_header
    _
  $region3: #{tpu_custom_call.1} parent=0 // loop_header
    %s12 = sphi 0, %s16
    %p13 = scmp.ge.s32.totalorder %s12, 4
    %s19 = sphi 0, %s31
    %s20 = sphi 0, %s27
    %s21 = sphi 0, %s19
    %s22 = sphi 0, %s20
    %s23 = sphi 0, %s21
    %s24 = sphi 0, %s22
    %s36 = sphi 0, %s38
    %s39 = sphi 0, %s36
    %s40 = sphi 0, %s39
    %s56 = sphi 0, %s40
    %s62 = sphi 0, %s64
    %s65 = sphi 0, %s62
    %s66 = sphi 0, %s65
    %s82 = sphi 0, %s66
    %s88 = sphi 0, %s90
    %s91 = sphi 0, %s88
    %s92 = sphi 0, %s91
    %s108 = sphi 0, %s92
    %s112 = sphi 0, %s112
    %s114 = sphi 0, %s112
    %s115 = sphi 0, %s114
    %s129 = sphi 0, %s115
    %s133 = sphi 0, %s133
    %s135 = sphi 0, %s133
    %s136 = sphi 0, %s135
    %s150 = sphi 0, %s136
    %s154 = sphi 0, %s154
    %s156 = sphi 0, %s154
    %s157 = sphi 0, %s156
    %s171 = sphi 0, %s157
    %s179 = sphi 0, %s181
    %s182 = sphi 0, %s179
    %s183 = sphi 0, %s182
    %s199 = sphi 0, %s183
  $region4: #{tpu_custom_call.1} parent=0 // loop_header_branch
    %15 = sbr.rel (%p13) target = $region8
  $region5: #{tpu_custom_call.1} parent=0 // loop_body
    %s17 = ssub.s32 %s12, 1
    %s18 = ssub.s32 %s12, 2
    %s25 = sadd.s32 1, %s20
    %p26 = scmp.ge.s32.totalorder %s25, 1
    %s27 = scalar_select %p26, 0, %s25
    %s28 = sadd.s32 1, %s19
    %s29 = scalar_select %p26, %s28, %s19
    %p30 = scmp.ge.s32.totalorder %s29, 2
    %s31 = scalar_select %p30, 0, %s29
    %s32 = ssub.s32 %s19, %s31
    %s33 = ssub.s32 %s20, %s27
    %s34 = sor.u32 %s32, %s33
    %p35 = scmp.eq.s32.totalorder %s34, 0
    %s37 = sadd.s32 %s36, 1
    %s38 = scalar_select %p35, %s36, %s37
    %p41 = pneg %p35
    %p42 = scmp.eq.s32.totalorder %s12, 1
    %p43 = por %p41, %p42
    %p44 = scmp.ne.s32.totalorder %s36, %s39
    %p45 = scmp.eq.s32.totalorder %s12, 0
    %p46 = por %p44, %p45
    %p47 = scmp.ne.s32.totalorder %s36, %s39
    %p48 = scmp.eq.s32.totalorder %s17, 1
    %p49 = por %p47, %p48
    %p50 = scmp.ne.s32.totalorder %s39, %s40
    %p51 = scmp.eq.s32.totalorder %s17, 0
    %p52 = por %p50, %p51
    %p53 = scmp.ne.s32.totalorder %s39, %s40
    %p54 = scmp.eq.s32.totalorder %s18, 1
    %p55 = por %p53, %p54
    %p57 = scmp.ne.s32.totalorder %s40, %s56
    %p58 = scmp.eq.s32.totalorder %s18, 0
    %p59 = por %p57, %p58
    %s60 = ssub.s32 %s19, %s31
    %p61 = scmp.eq.s32.totalorder %s60, 0
    %s63 = sadd.s32 %s62, 1
    %s64 = scalar_select %p61, %s62, %s63
    %p67 = pneg %p61
    %p68 = scmp.eq.s32.totalorder %s12, 1
    %p69 = por %p67, %p68
    %p70 = scmp.ne.s32.totalorder %s62, %s65
    %p71 = scmp.eq.s32.totalorder %s12, 0
    %p72 = por %p70, %p71
    %p73 = scmp.ne.s32.totalorder %s62, %s65
    %p74 = scmp.eq.s32.totalorder %s17, 1
    %p75 = por %p73, %p74
    %p76 = scmp.ne.s32.totalorder %s65, %s66
    %p77 = scmp.eq.s32.totalorder %s17, 0
    %p78 = por %p76, %p77
    %p79 = scmp.ne.s32.totalorder %s65, %s66
    %p80 = scmp.eq.s32.totalorder %s18, 1
    %p81 = por %p79, %p80
    %p83 = scmp.ne.s32.totalorder %s66, %s82
    %p84 = scmp.eq.s32.totalorder %s18, 0
    %p85 = por %p83, %p84
    %s86 = ssub.s32 %s19, %s31
    %p87 = scmp.eq.s32.totalorder %s86, 0
    %s89 = sadd.s32 %s88, 1
    %s90 = scalar_select %p87, %s88, %s89
    %p93 = pneg %p87
    %p94 = scmp.eq.s32.totalorder %s12, 1
    %p95 = por %p93, %p94
    %p96 = scmp.ne.s32.totalorder %s88, %s91
    %p97 = scmp.eq.s32.totalorder %s12, 0
    %p98 = por %p96, %p97
    %p99 = scmp.ne.s32.totalorder %s88, %s91
    %p100 = scmp.eq.s32.totalorder %s17, 1
    %p101 = por %p99, %p100
    %p102 = scmp.ne.s32.totalorder %s91, %s92
    %p103 = scmp.eq.s32.totalorder %s17, 0
    %p104 = por %p102, %p103
    %p105 = scmp.ne.s32.totalorder %s91, %s92
    %p106 = scmp.eq.s32.totalorder %s18, 1
    %p107 = por %p105, %p106
    %p109 = scmp.ne.s32.totalorder %s92, %s108
    %p110 = scmp.eq.s32.totalorder %s18, 0
    %p111 = por %p109, %p110
    %s113 = sadd.s32 %s112, 1
    %p116 = scmp.eq.s32.totalorder %s12, 1
    %p117 = scmp.ne.s32.totalorder %s112, %s114
    %p118 = scmp.eq.s32.totalorder %s12, 0
    %p119 = por %p117, %p118
    %p120 = scmp.ne.s32.totalorder %s112, %s114
    %p121 = scmp.eq.s32.totalorder %s17, 1
    %p122 = por %p120, %p121
    %p123 = scmp.ne.s32.totalorder %s114, %s115
    %p124 = scmp.eq.s32.totalorder %s17, 0
    %p125 = por %p123, %p124
    %p126 = scmp.ne.s32.totalorder %s114, %s115
    %p127 = scmp.eq.s32.totalorder %s18, 1
    %p128 = por %p126, %p127
    %p130 = scmp.ne.s32.totalorder %s115, %s129
    %p131 = scmp.eq.s32.totalorder %s18, 0
    %p132 = por %p130, %p131
    %s134 = sadd.s32 %s133, 1
    %p137 = scmp.eq.s32.totalorder %s12, 1
    %p138 = scmp.ne.s32.totalorder %s133, %s135
    %p139 = scmp.eq.s32.totalorder %s12, 0
    %p140 = por %p138, %p139
    %p141 = scmp.ne.s32.totalorder %s133, %s135
    %p142 = scmp.eq.s32.totalorder %s17, 1
    %p143 = por %p141, %p142
    %p144 = scmp.ne.s32.totalorder %s135, %s136
    %p145 = scmp.eq.s32.totalorder %s17, 0
    %p146 = por %p144, %p145
    %p147 = scmp.ne.s32.totalorder %s135, %s136
    %p148 = scmp.eq.s32.totalorder %s18, 1
    %p149 = por %p147, %p148
    %p151 = scmp.ne.s32.totalorder %s136, %s150
    %p152 = scmp.eq.s32.totalorder %s18, 0
    %p153 = por %p151, %p152
    %s155 = sadd.s32 %s154, 1
    %p158 = scmp.eq.s32.totalorder %s12, 1
    %p159 = scmp.ne.s32.totalorder %s154, %s156
    %p160 = scmp.eq.s32.totalorder %s12, 0
    %p161 = por %p159, %p160
    %p162 = scmp.ne.s32.totalorder %s154, %s156
    %p163 = scmp.eq.s32.totalorder %s17, 1
    %p164 = por %p162, %p163
    %p165 = scmp.ne.s32.totalorder %s156, %s157
    %p166 = scmp.eq.s32.totalorder %s17, 0
    %p167 = por %p165, %p166
    %p168 = scmp.ne.s32.totalorder %s156, %s157
    %p169 = scmp.eq.s32.totalorder %s18, 1
    %p170 = por %p168, %p169
    %p172 = scmp.ne.s32.totalorder %s157, %s171
    %p173 = scmp.eq.s32.totalorder %s18, 0
    %p174 = por %p172, %p173
    %s175 = ssub.s32 %s19, %s31
    %s176 = ssub.s32 %s20, %s27
    %s177 = sor.u32 %s175, %s176
    %p178 = scmp.eq.s32.totalorder %s177, 0
    %s180 = sadd.s32 %s179, 1
    %s181 = scalar_select %p178, %s179, %s180
    %p184 = pneg %p178
    %p185 = scmp.eq.s32.totalorder %s12, 1
    %p186 = por %p184, %p185
    %p187 = scmp.ne.s32.totalorder %s179, %s182
    %p188 = scmp.eq.s32.totalorder %s12, 0
    %p189 = por %p187, %p188
    %p190 = scmp.ne.s32.totalorder %s179, %s182
    %p191 = scmp.eq.s32.totalorder %s17, 1
    %p192 = por %p190, %p191
    %p193 = scmp.ne.s32.totalorder %s182, %s183
    %p194 = scmp.eq.s32.totalorder %s17, 0
    %p195 = por %p193, %p194
    %p196 = scmp.ne.s32.totalorder %s182, %s183
    %p197 = scmp.eq.s32.totalorder %s18, 1
    %p198 = por %p196, %p197
    %p200 = scmp.ne.s32.totalorder %s183, %s199
    %p201 = scmp.eq.s32.totalorder %s18, 0
    %p202 = por %p200, %p201
    %p203 = scmp.le.s32.totalorder 1, %s12
    %p204 = scmp.lt.s32.totalorder %s12, 3
    %p205 = pnand %p203, %p204
    %p206 = pneg %p205
    // Predicated region
    $region9: #{tpu_custom_call.1} parent=5 // pred_check
      _
    $region10: #{tpu_custom_call.1} parent=5 // pred_check_branch
      %208 = sbr.rel (%p205) target = $region12
    $region11: #{tpu_custom_call.1} parent=5 // pred_region
      %s209 = ssub.s32 %s12, 1
      // Predicated region
      $region13: #{tpu_custom_call.1} parent=11 // pred_check
        %p210 = pneg %p125
      $region14: #{tpu_custom_call.1} parent=11 // pred_check_branch
        %212 = sbr.rel (%p210) target = $region16
      $region15: #{tpu_custom_call.1} parent=11 // pred_region
        _
      $region16: #{tpu_custom_call.1} parent=11 // pred_fallthru
        _
      // Predicated region
      $region17: #{tpu_custom_call.1} parent=11 // pred_check
        %p213 = pneg %p146
      $region18: #{tpu_custom_call.1} parent=11 // pred_check_branch
        %215 = sbr.rel (%p213) target = $region20
      $region19: #{tpu_custom_call.1} parent=11 // pred_region
        _
      $region20: #{tpu_custom_call.1} parent=11 // pred_fallthru
        _
      // Predicated region
      $region21: #{tpu_custom_call.1} parent=11 // pred_check
        %p216 = pneg %p167
      $region22: #{tpu_custom_call.1} parent=11 // pred_check_branch
        %218 = sbr.rel (%p216) target = $region24
      $region23: #{tpu_custom_call.1} parent=11 // pred_region
        _
      $region24: #{tpu_custom_call.1} parent=11 // pred_fallthru
        _
    $region12: #{tpu_custom_call.1} parent=5 // pred_fallthru
      _
    %p219 = scmp.lt.s32.totalorder %s12, 2
    // Predicated region
    $region25: #{tpu_custom_call.1} parent=5 // pred_check
      %p220 = pneg %p219
    $region26: #{tpu_custom_call.1} parent=5 // pred_check_branch
      %222 = sbr.rel (%p220) target = $region28
    $region27: #{tpu_custom_call.1} parent=5 // pred_region
      // Predicated region
      $region29: #{tpu_custom_call.1} parent=27 // pred_check
        %p223 = pneg %p46
      $region30: #{tpu_custom_call.1} parent=27 // pred_check_branch
        %225 = sbr.rel (%p223) target = $region32
      $region31: #{tpu_custom_call.1} parent=27 // pred_region
        %p226 = scmp.lt.s32.totalorder %s19, 1
        %s227 = scalar_select %p226, %s19, 1
        %p228 = scmp.lt.s32.totalorder %s20, 0
        %s229 = scalar_select %p228, %s20, 0
        %s230 = smul.addr %s227, 4
        %s231 = sadd.s32 %s229, %s230
        %s232 = smul.addr %s231, 8
        %s233 = scalar_lea.vmem %s0, %s232
      $region32: #{tpu_custom_call.1} parent=27 // pred_fallthru
        _
      // Predicated region
      $region33: #{tpu_custom_call.1} parent=27 // pred_check
        %p234 = pneg %p72
      $region34: #{tpu_custom_call.1} parent=27 // pred_check_branch
        %236 = sbr.rel (%p234) target = $region36
      $region35: #{tpu_custom_call.1} parent=27 // pred_region
        %p237 = scmp.lt.s32.totalorder %s19, 1
        %s238 = scalar_select %p237, %s19, 1
        %s239 = smul.addr %s238, 4
        %s240 = smul.addr %s239, 8
        %s241 = scalar_lea.vmem %s1, %s240
      $region36: #{tpu_custom_call.1} parent=27 // pred_fallthru
        _
      // Predicated region
      $region37: #{tpu_custom_call.1} parent=27 // pred_check
        %p242 = pneg %p98
      $region38: #{tpu_custom_call.1} parent=27 // pred_check_branch
        %244 = sbr.rel (%p242) target = $region40
      $region39: #{tpu_custom_call.1} parent=27 // pred_region
        %p245 = scmp.lt.s32.totalorder %s19, 1
        %s246 = scalar_select %p245, %s19, 1
        %s247 = smul.addr %s246, 4
        %s248 = smul.addr %s247, 8
        %s249 = scalar_lea.vmem %s2, %s248
      $region40: #{tpu_custom_call.1} parent=27 // pred_fallthru
        _
    $region28: #{tpu_custom_call.1} parent=5 // pred_fallthru
      _
    %p250 = scmp.le.s32.totalorder 1, %s12
    %p251 = scmp.lt.s32.totalorder %s12, 3
    %p252 = pnand %p250, %p251
    %p253 = pneg %p252
    // Predicated region
    $region41: #{tpu_custom_call.1} parent=5 // pred_check
      _
    $region42: #{tpu_custom_call.1} parent=5 // pred_check_branch
      %255 = sbr.rel (%p252) target = $region44
    $region43: #{tpu_custom_call.1} parent=5 // pred_region
      %s256 = ssub.s32 %s12, 1
      %p257 = scmp.lt.s32.totalorder %s21, 1
      %s258 = scalar_select %p257, %s21, 1
      %p259 = scmp.lt.s32.totalorder %s22, 0
      %s260 = scalar_select %p259, %s22, 0
      %s261 = smul.addr %s258, 4
      %s262 = sadd.s32 %s260, %s261
      %s263 = smul.addr %s262, 8
      %s264 = scalar_lea.vmem %s0, %s263
      %p265 = pneg %p52
      %p266 = pneg %p49
      %p267 = scmp.lt.s32.totalorder %s21, 1
      %s268 = scalar_select %p267, %s21, 1
      %s269 = smul.addr %s268, 4
      %s270 = smul.addr %s269, 8
      %s271 = scalar_lea.vmem %s1, %s270
      %p272 = pneg %p78
      %p273 = pneg %p75
      %p274 = scmp.lt.s32.totalorder %s21, 1
      %s275 = scalar_select %p274, %s21, 1
      %s276 = smul.addr %s275, 4
      %s277 = smul.addr %s276, 8
      %s278 = scalar_lea.vmem %s2, %s277
      %p279 = pneg %p104
      %p280 = pneg %p101
      %p281 = pneg %p125
      %p282 = pneg %p122
      %p283 = pneg %p146
      %p284 = pneg %p143
      %p285 = pneg %p167
      %p286 = pneg %p164
      %p287 = pneg %p195
      %p288 = pneg %p192
      %p289 = scmp.lt.s32.totalorder %s21, 1
      %s290 = scalar_select %p289, %s21, 1
      %p291 = scmp.lt.s32.totalorder %s22, 0
      %s292 = scalar_select %p291, %s22, 0
      %s293 = smul.addr %s290, 4
      %s294 = sadd.s32 %s292, %s293
      %s295 = smul.addr %s294, 8
      %s296 = scalar_lea.vmem %s6, %s295
      %p297 = scmp.lt.s32.totalorder %s21, 1
      %s298 = scalar_select %p297, %s21, 1
      %p299 = scmp.lt.s32.totalorder %s22, 0
      %s300 = scalar_select %p299, %s22, 0
      %s301 = smul.addr %s298, 4
      %s302 = sadd.s32 %s300, %s301
      %s303 = smul.addr %s302, 8
      %s304 = scalar_lea.vmem %s0, %s303
      %p305 = scmp.lt.s32.totalorder %s21, 1
      %s306 = scalar_select %p305, %s21, 1
      %s307 = smul.addr %s306, 4
      %s308 = smul.addr %s307, 8
      %s309 = scalar_lea.vmem %s1, %s308
      %p310 = scmp.lt.s32.totalorder %s21, 1
      %s311 = scalar_select %p310, %s21, 1
      %s312 = smul.addr %s311, 4
      %s313 = smul.addr %s312, 8
      %s314 = scalar_lea.vmem %s2, %s313
      %p315 = scmp.lt.s32.totalorder %s21, 1
      %s316 = scalar_select %p315, %s21, 1
      %p317 = scmp.lt.s32.totalorder %s22, 0
      %s318 = scalar_select %p317, %s22, 0
      %s319 = smul.addr %s316, 4
      %s320 = sadd.s32 %s318, %s319
      %s321 = smul.addr %s320, 8
      %s322 = scalar_lea.vmem %s6, %s321
      %v323 = vld [vmem:[%s4] sm:$0xff]
      %v324 = vld [vmem:[%s4 + $0x8] sm:$0xff]
      %v325 = vld [vmem:[%s4 + $0x10] sm:$0xff]
      %v326 = vld [vmem:[%s4 + $0x18] sm:$0xff]
      %v327 = vld [vmem:[%s3] sm:$0xff]
      %v328 = vld [vmem:[%s3 + $0x8] sm:$0xff]
      %v329 = vld [vmem:[%s3 + $0x10] sm:$0xff]
      %v330 = vld [vmem:[%s3 + $0x18] sm:$0xff]
      %v331 = vld [vmem:[%s304] sm:$0xff]
      %v332 = vld [vmem:[%s304 + $0x8] sm:$0xff]
      %v333 = vld [vmem:[%s304 + $0x10] sm:$0xff]
      %v334 = vld [vmem:[%s304 + $0x18] sm:$0xff]
      %336 = vset.pattern.permute.xlu0 0
      %337 = vperm.xlu0 %336, %v323
      %v338 = vpop.permute.xlu0 %337
      %341 = vset.pattern.permute.xlu0 0
      %342 = vperm.xlu0 %341, %v324
      %v343 = vpop.permute.xlu0 %342
      %346 = vset.pattern.permute.xlu0 0
      %347 = vperm.xlu0 %346, %v325
      %v348 = vpop.permute.xlu0 %347
      %351 = vset.pattern.permute.xlu0 0
      %352 = vperm.xlu0 %351, %v326
      %v353 = vpop.permute.xlu0 %352
      %vm355 = vcmask 261120
      %v357 = vsel %vm355, %v327, 0
      %v360 = vsel %vm355, %v328, 0
      %v363 = vsel %vm355, %v329, 0
      %v366 = vsel %vm355, %v330, 0
      %368 = vmatpush.msra.mxu0 0.0
      %369 = vmatpush.msra.mxu0 0.0
      %370 = vmatpush.msra.mxu0 0.0
      %371 = vmatpush.msra.mxu0 0.0
      %372 = vmatpush.msra.mxu0 0.0
      %373 = vmatpush.msra.mxu0 0.0
      %374 = vmatpush.msra.mxu0 0.0
      %375 = vmatpush.msra.mxu0 0.0
      %376 = vmatpush.msra.mxu0 0.0
      %377 = vmatpush.msra.mxu0 0.0
      %378 = vmatpush.msra.mxu0 0.0
      %379 = vmatpush.msra.mxu0 0.0
      %380 = vmatpush.msra.mxu0 %v334
      %381 = vmatpush.msra.mxu0 %v333
      %382 = vmatpush.msra.mxu0 %v332
      %383 = vmatpush.msra.mxu0 %v331
      %384 = vmatmul.f32.gmra.mxu0 %v357
      %v385 = vpop.f32.mrf.mxu0
      %v386 = vadd.f32 %v338, %v385
      %387 = vmatmul.f32.gmra.mxu0 %v360
      %v388 = vpop.f32.mrf.mxu0
      %v389 = vadd.f32 %v343, %v388
      %390 = vmatmul.f32.gmra.mxu0 %v363
      %v391 = vpop.f32.mrf.mxu0
      %v392 = vadd.f32 %v348, %v391
      %393 = vmatmul.f32.gmra.mxu0 %v366
      %v394 = vpop.f32.mrf.mxu0
      %v395 = vadd.f32 %v353, %v394
      %396 = vdwg.mxu0
      %vm397 = vcmask 130048
      %398 = vst.msk [vmem:[#allocation2] sm:$0xff] %vm397, %v386
      %399 = vst.msk [vmem:[#allocation2 + $0x8] sm:$0xff] %vm397, %v389
      %400 = vst.msk [vmem:[#allocation2 + $0x10] sm:$0xff] %vm397, %v392
      %401 = vst.msk [vmem:[#allocation2 + $0x18] sm:$0xff] %vm397, %v395
      %s402 = scalar_lea.vmem %s3, 32
      %v403 = vld [vmem:[%s402] sm:$0xff]
      %v404 = vld [vmem:[%s402 + $0x8] sm:$0xff]
      %v405 = vld [vmem:[%s402 + $0x10] sm:$0xff]
      %v406 = vld [vmem:[%s402 + $0x18] sm:$0xff]
      %v407 = vld [vmem:[%s309] sm:$0xff]
      %v408 = vld [vmem:[%s309 + $0x8] sm:$0xff]
      %v409 = vld [vmem:[%s309 + $0x10] sm:$0xff]
      %v410 = vld [vmem:[%s309 + $0x18] sm:$0xff]
      %411 = vset.pattern.permute.xlu0 1
      %412 = vperm.xlu0 %411, %v323
      %v413 = vpop.permute.xlu0 %412
      %415 = vset.pattern.permute.xlu0 1
      %416 = vperm.xlu0 %415, %v324
      %v417 = vpop.permute.xlu0 %416
      %419 = vset.pattern.permute.xlu0 1
      %420 = vperm.xlu0 %419, %v325
      %v421 = vpop.permute.xlu0 %420
      %423 = vset.pattern.permute.xlu0 1
      %424 = vperm.xlu0 %423, %v326
      %v425 = vpop.permute.xlu0 %424
      %v428 = vsel %vm355, %v403, 0
      %v431 = vsel %vm355, %v404, 0
      %v434 = vsel %vm355, %v405, 0
      %v437 = vsel %vm355, %v406, 0
      %439 = vmatpush.msra.mxu0 0.0
      %440 = vmatpush.msra.mxu0 0.0
      %441 = vmatpush.msra.mxu0 0.0
      %442 = vmatpush.msra.mxu0 0.0
      %443 = vmatpush.msra.mxu0 0.0
      %444 = vmatpush.msra.mxu0 0.0
      %445 = vmatpush.msra.mxu0 0.0
      %446 = vmatpush.msra.mxu0 0.0
      %447 = vmatpush.msra.mxu0 0.0
      %448 = vmatpush.msra.mxu0 0.0
      %449 = vmatpush.msra.mxu0 0.0
      %450 = vmatpush.msra.mxu0 0.0
      %451 = vmatpush.msra.mxu0 %v410
      %452 = vmatpush.msra.mxu0 %v409
      %453 = vmatpush.msra.mxu0 %v408
      %454 = vmatpush.msra.mxu0 %v407
      %455 = vmatmul.f32.gmra.mxu0 %v428
      %v456 = vpop.f32.mrf.mxu0
      %v457 = vadd.f32 %v413, %v456
      %458 = vmatmul.f32.gmra.mxu0 %v431
      %v459 = vpop.f32.mrf.mxu0
      %v460 = vadd.f32 %v417, %v459
      %461 = vmatmul.f32.gmra.mxu0 %v434
      %v462 = vpop.f32.mrf.mxu0
      %v463 = vadd.f32 %v421, %v462
      %464 = vmatmul.f32.gmra.mxu0 %v437
      %v465 = vpop.f32.mrf.mxu0
      %v466 = vadd.f32 %v425, %v465
      %467 = vdwg.mxu0
      %468 = vst.msk [vmem:[#allocation3] sm:$0xff] %vm397, %v457
      %469 = vst.msk [vmem:[#allocation3 + $0x8] sm:$0xff] %vm397, %v460
      %470 = vst.msk [vmem:[#allocation3 + $0x10] sm:$0xff] %vm397, %v463
      %471 = vst.msk [vmem:[#allocation3 + $0x18] sm:$0xff] %vm397, %v466
      %s472 = scalar_lea.vmem %s3, 64
      %v473 = vld [vmem:[%s472] sm:$0xff]
      %v474 = vld [vmem:[%s472 + $0x8] sm:$0xff]
      %v475 = vld [vmem:[%s472 + $0x10] sm:$0xff]
      %v476 = vld [vmem:[%s472 + $0x18] sm:$0xff]
      %v477 = vld [vmem:[%s314] sm:$0xff]
      %v478 = vld [vmem:[%s314 + $0x8] sm:$0xff]
      %v479 = vld [vmem:[%s314 + $0x10] sm:$0xff]
      %v480 = vld [vmem:[%s314 + $0x18] sm:$0xff]
      %481 = vset.pattern.permute.xlu0 2
      %482 = vperm.xlu0 %481, %v323
      %v483 = vpop.permute.xlu0 %482
      %485 = vset.pattern.permute.xlu0 2
      %486 = vperm.xlu0 %485, %v324
      %v487 = vpop.permute.xlu0 %486
      %489 = vset.pattern.permute.xlu0 2
      %490 = vperm.xlu0 %489, %v325
      %v491 = vpop.permute.xlu0 %490
      %493 = vset.pattern.permute.xlu0 2
      %494 = vperm.xlu0 %493, %v326
      %v495 = vpop.permute.xlu0 %494
      %v498 = vsel %vm355, %v473, 0
      %v501 = vsel %vm355, %v474, 0
      %v504 = vsel %vm355, %v475, 0
      %v507 = vsel %vm355, %v476, 0
      %509 = vmatpush.msra.mxu0 0.0
      %510 = vmatpush.msra.mxu0 0.0
      %511 = vmatpush.msra.mxu0 0.0
      %512 = vmatpush.msra.mxu0 0.0
      %513 = vmatpush.msra.mxu0 0.0
      %514 = vmatpush.msra.mxu0 0.0
      %515 = vmatpush.msra.mxu0 0.0
      %516 = vmatpush.msra.mxu0 0.0
      %517 = vmatpush.msra.mxu0 0.0
      %518 = vmatpush.msra.mxu0 0.0
      %519 = vmatpush.msra.mxu0 0.0
      %520 = vmatpush.msra.mxu0 0.0
      %521 = vmatpush.msra.mxu0 %v480
      %522 = vmatpush.msra.mxu0 %v479
      %523 = vmatpush.msra.mxu0 %v478
      %524 = vmatpush.msra.mxu0 %v477
      %525 = vmatmul.f32.gmra.mxu0 %v498
      %v526 = vpop.f32.mrf.mxu0
      %v527 = vadd.f32 %v483, %v526
      %528 = vmatmul.f32.gmra.mxu0 %v501
      %v529 = vpop.f32.mrf.mxu0
      %v530 = vadd.f32 %v487, %v529
      %531 = vmatmul.f32.gmra.mxu0 %v504
      %v532 = vpop.f32.mrf.mxu0
      %v533 = vadd.f32 %v491, %v532
      %534 = vmatmul.f32.gmra.mxu0 %v507
      %v535 = vpop.f32.mrf.mxu0
      %v536 = vadd.f32 %v495, %v535
      %537 = vdwg.mxu0
      %538 = vst.msk [vmem:[#allocation4] sm:$0xff] %vm397, %v527
      %539 = vst.msk [vmem:[#allocation4 + $0x8] sm:$0xff] %vm397, %v530
      %540 = vst.msk [vmem:[#allocation4 + $0x10] sm:$0xff] %vm397, %v533
      %541 = vst.msk [vmem:[#allocation4 + $0x18] sm:$0xff] %vm397, %v536
      %v542 = vld [vmem:[#allocation2] sm:$0xff]
      %v543 = vld [vmem:[#allocation3] sm:$0xff]
      %v544 = vld [vmem:[#allocation4] sm:$0xff]
      %545 = vxpose.xlu0.b32.start [1/16] %v542, 128
      %546 = vxpose.xlu0.b32.cont [2/16] 0.0, 128
      %547 = vxpose.xlu0.b32.cont [3/16] 0.0, 128
      %548 = vxpose.xlu0.b32.cont [4/16] 0.0, 128
      %549 = vxpose.xlu0.b32.cont [5/16] 0.0, 128
      %550 = vxpose.xlu0.b32.cont [6/16] 0.0, 128
      %551 = vxpose.xlu0.b32.cont [7/16] 0.0, 128
      %552 = vxpose.xlu0.b32.cont [8/16] 0.0, 128
      %553 = vxpose.xlu0.b32.cont [9/16] 0.0, 128
      %554 = vxpose.xlu0.b32.cont [10/16] 0.0, 128
      %555 = vxpose.xlu0.b32.cont [11/16] 0.0, 128
      %556 = vxpose.xlu0.b32.cont [12/16] 0.0, 128
      %557 = vxpose.xlu0.b32.cont [13/16] 0.0, 128
      %558 = vxpose.xlu0.b32.cont [14/16] 0.0, 128
      %559 = vxpose.xlu0.b32.cont [15/16] 0.0, 128
      %560 = vxpose.xlu0.b32.end [16/16] 0.0, 128
      %v561 = vpop.trf.xlu0
      %v562 = vpop.trf.xlu0
      %v563 = vpop.trf.xlu0
      %v564 = vpop.trf.xlu0
      %v565 = vpop.trf.xlu0
      %v566 = vpop.trf.xlu0
      %v567 = vpop.trf.xlu0
      %v568 = vpop.trf.xlu0
      %v569 = vpop.trf.xlu0
      %v570 = vpop.trf.xlu0
      %v571 = vpop.trf.xlu0
      %v572 = vpop.trf.xlu0
      %v573 = vpop.trf.xlu0
      %v574 = vpop.trf.xlu0
      %v575 = vpop.trf.xlu0
      %v576 = vpop.trf.xlu0
      %vm577 = vcmask 64512
      %v579 = vsel %vm577, %v561, 0
      %v582 = vsel %vm577, %v562, 0
      %584 = vmatpush.msra.mxu0 0.0
      %585 = vmatpush.msra.mxu0 0.0
      %586 = vmatpush.msra.mxu0 0.0
      %587 = vmatpush.msra.mxu0 0.0
      %588 = vmatpush.msra.mxu0 0.0
      %589 = vmatpush.msra.mxu0 0.0
      %590 = vmatpush.msra.mxu0 0.0
      %591 = vmatpush.msra.mxu0 0.0
      %592 = vmatpush.msra.mxu0 0.0
      %593 = vmatpush.msra.mxu0 0.0
      %594 = vmatpush.msra.mxu0 0.0
      %595 = vmatpush.msra.mxu0 0.0
      %596 = vmatpush.msra.mxu0 0.0
      %597 = vmatpush.msra.mxu0 0.0
      %598 = vmatpush.msra.mxu0 0.0
      %599 = vmatpush.msra.mxu0 %v543
      %600 = vmatmul.f32.gmra.mxu0 %v579
      %v601 = vpop.f32.mrf.mxu0
      %v602 = vadd.f32 0.0, %v601
      %603 = vmatmul.f32.gmra.mxu0 %v582
      %v604 = vpop.f32.mrf.mxu0
      %v605 = vadd.f32 0.0, %v604
      %606 = vdwg.mxu0
      %v607 = vmul.f32 %v602, 0.35355338
      %v608 = vmul.f32 %v605, 0.35355338
      %v609 = vsel %vm397, %v607, -inf
      %610 = vmax.xlane.f32.xlu0 %v609
      %v611 = vpop.xlane.xlu0 %610
      %v612 = vsel %vm397, %v608, -inf
      %613 = vmax.xlane.f32.xlu0 %v612
      %v614 = vpop.xlane.xlu0 %613
      %v615 = vsub.f32 %v607, %v611
      %v616 = vsub.f32 %v608, %v614
      %v617 = vmul.f32 %v615, 1.442695
      %v618 = vpow.pop %v617
      %v619 = vmul.f32 %v616, 1.442695
      %v620 = vpow.pop %v619
      %v621 = vsel %vm397, %v618, 0.0
      %622 = vadd.xlane.f32.xlu0 %v621
      %v623 = vpop.xlane.xlu0 %622
      %v624 = vsel %vm397, %v620, 0.0
      %625 = vadd.xlane.f32.xlu0 %v624
      %v626 = vpop.xlane.xlu0 %625
      %v627 = vrcp.pop %v623
      %v628 = vrcp.pop %v626
      %v629 = vmul.f32 %v618, %v627
      %v630 = vmul.f32 %v620, %v628
      %v632 = vsel %vm397, %v544, 0
      %v635 = vsel %vm397, %v629, 0
      %v638 = vsel %vm397, %v630, 0
      %640 = vmatpush.xpose.msra.mxu0 0.0
      %641 = vmatpush.xpose.msra.mxu0 0.0
      %642 = vmatpush.xpose.msra.mxu0 0.0
      %643 = vmatpush.xpose.msra.mxu0 0.0
      %644 = vmatpush.xpose.msra.mxu0 0.0
      %645 = vmatpush.xpose.msra.mxu0 0.0
      %646 = vmatpush.xpose.msra.mxu0 0.0
      %647 = vmatpush.xpose.msra.mxu0 0.0
      %648 = vmatpush.xpose.msra.mxu0 0.0
      %649 = vmatpush.xpose.msra.mxu0 0.0
      %650 = vmatpush.xpose.msra.mxu0 0.0
      %651 = vmatpush.xpose.msra.mxu0 0.0
      %652 = vmatpush.xpose.msra.mxu0 0.0
      %653 = vmatpush.xpose.msra.mxu0 0.0
      %654 = vmatpush.xpose.msra.mxu0 %v638
      %655 = vmatpush.xpose.msra.mxu0 %v635
      %656 = vmatmul.f32.gmra.mxu0 %v632
      %v657 = vpop.f32.mrf.mxu0
      %v658 = vadd.f32 0.0, %v657
      %659 = vdwg.mxu0
      %660 = vst.msk [vmem:[#allocation5] sm:$0xff] %vm397, %v658
      %v661 = vld [vmem:[#allocation2 + $0x8] sm:$0xff]
      %v662 = vld [vmem:[#allocation3 + $0x8] sm:$0xff]
      %v663 = vld [vmem:[#allocation4 + $0x8] sm:$0xff]
      %664 = vxpose.xlu0.b32.start [1/16] %v661, 128
      %665 = vxpose.xlu0.b32.cont [2/16] 0.0, 128
      %666 = vxpose.xlu0.b32.cont [3/16] 0.0, 128
      %667 = vxpose.xlu0.b32.cont [4/16] 0.0, 128
      %668 = vxpose.xlu0.b32.cont [5/16] 0.0, 128
      %669 = vxpose.xlu0.b32.cont [6/16] 0.0, 128
      %670 = vxpose.xlu0.b32.cont [7/16] 0.0, 128
      %671 = vxpose.xlu0.b32.cont [8/16] 0.0, 128
      %672 = vxpose.xlu0.b32.cont [9/16] 0.0, 128
      %673 = vxpose.xlu0.b32.cont [10/16] 0.0, 128
      %674 = vxpose.xlu0.b32.cont [11/16] 0.0, 128
      %675 = vxpose.xlu0.b32.cont [12/16] 0.0, 128
      %676 = vxpose.xlu0.b32.cont [13/16] 0.0, 128
      %677 = vxpose.xlu0.b32.cont [14/16] 0.0, 128
      %678 = vxpose.xlu0.b32.cont [15/16] 0.0, 128
      %679 = vxpose.xlu0.b32.end [16/16] 0.0, 128
      %v680 = vpop.trf.xlu0
      %v681 = vpop.trf.xlu0
      %v682 = vpop.trf.xlu0
      %v683 = vpop.trf.xlu0
      %v684 = vpop.trf.xlu0
      %v685 = vpop.trf.xlu0
      %v686 = vpop.trf.xlu0
      %v687 = vpop.trf.xlu0
      %v688 = vpop.trf.xlu0
      %v689 = vpop.trf.xlu0
      %v690 = vpop.trf.xlu0
      %v691 = vpop.trf.xlu0
      %v692 = vpop.trf.xlu0
      %v693 = vpop.trf.xlu0
      %v694 = vpop.trf.xlu0
      %v695 = vpop.trf.xlu0
      %v697 = vsel %vm577, %v680, 0
      %v700 = vsel %vm577, %v681, 0
      %702 = vmatpush.msra.mxu0 0.0
      %703 = vmatpush.msra.mxu0 0.0
      %704 = vmatpush.msra.mxu0 0.0
      %705 = vmatpush.msra.mxu0 0.0
      %706 = vmatpush.msra.mxu0 0.0
      %707 = vmatpush.msra.mxu0 0.0
      %708 = vmatpush.msra.mxu0 0.0
      %709 = vmatpush.msra.mxu0 0.0
      %710 = vmatpush.msra.mxu0 0.0
      %711 = vmatpush.msra.mxu0 0.0
      %712 = vmatpush.msra.mxu0 0.0
      %713 = vmatpush.msra.mxu0 0.0
      %714 = vmatpush.msra.mxu0 0.0
      %715 = vmatpush.msra.mxu0 0.0
      %716 = vmatpush.msra.mxu0 0.0
      %717 = vmatpush.msra.mxu0 %v662
      %718 = vmatmul.f32.gmra.mxu0 %v697
      %v719 = vpop.f32.mrf.mxu0
      %v720 = vadd.f32 0.0, %v719
      %721 = vmatmul.f32.gmra.mxu0 %v700
      %v722 = vpop.f32.mrf.mxu0
      %v723 = vadd.f32 0.0, %v722
      %724 = vdwg.mxu0
      %v725 = vmul.f32 %v720, 0.35355338
      %v726 = vmul.f32 %v723, 0.35355338
      %v727 = vsel %vm397, %v725, -inf
      %728 = vmax.xlane.f32.xlu0 %v727
      %v729 = vpop.xlane.xlu0 %728
      %v730 = vsel %vm397, %v726, -inf
      %731 = vmax.xlane.f32.xlu0 %v730
      %v732 = vpop.xlane.xlu0 %731
      %v733 = vsub.f32 %v725, %v729
      %v734 = vsub.f32 %v726, %v732
      %v735 = vmul.f32 %v733, 1.442695
      %v736 = vpow.pop %v735
      %v737 = vmul.f32 %v734, 1.442695
      %v738 = vpow.pop %v737
      %v739 = vsel %vm397, %v736, 0.0
      %740 = vadd.xlane.f32.xlu0 %v739
      %v741 = vpop.xlane.xlu0 %740
      %v742 = vsel %vm397, %v738, 0.0
      %743 = vadd.xlane.f32.xlu0 %v742
      %v744 = vpop.xlane.xlu0 %743
      %v745 = vrcp.pop %v741
      %v746 = vrcp.pop %v744
      %v747 = vmul.f32 %v736, %v745
      %v748 = vmul.f32 %v738, %v746
      %v750 = vsel %vm397, %v663, 0
      %v753 = vsel %vm397, %v747, 0
      %v756 = vsel %vm397, %v748, 0
      %758 = vmatpush.xpose.msra.mxu0 0.0
      %759 = vmatpush.xpose.msra.mxu0 0.0
      %760 = vmatpush.xpose.msra.mxu0 0.0
      %761 = vmatpush.xpose.msra.mxu0 0.0
      %762 = vmatpush.xpose.msra.mxu0 0.0
      %763 = vmatpush.xpose.msra.mxu0 0.0
      %764 = vmatpush.xpose.msra.mxu0 0.0
      %765 = vmatpush.xpose.msra.mxu0 0.0
      %766 = vmatpush.xpose.msra.mxu0 0.0
      %767 = vmatpush.xpose.msra.mxu0 0.0
      %768 = vmatpush.xpose.msra.mxu0 0.0
      %769 = vmatpush.xpose.msra.mxu0 0.0
      %770 = vmatpush.xpose.msra.mxu0 0.0
      %771 = vmatpush.xpose.msra.mxu0 0.0
      %772 = vmatpush.xpose.msra.mxu0 %v756
      %773 = vmatpush.xpose.msra.mxu0 %v753
      %774 = vmatmul.f32.gmra.mxu0 %v750
      %v775 = vpop.f32.mrf.mxu0
      %v776 = vadd.f32 0.0, %v775
      %777 = vdwg.mxu0
      %778 = vst.msk [vmem:[#allocation5 + $0x8] sm:$0xff] %vm397, %v776
      %v779 = vld [vmem:[#allocation2 + $0x10] sm:$0xff]
      %v780 = vld [vmem:[#allocation3 + $0x10] sm:$0xff]
      %v781 = vld [vmem:[#allocation4 + $0x10] sm:$0xff]
      %782 = vxpose.xlu0.b32.start [1/16] %v779, 128
      %783 = vxpose.xlu0.b32.cont [2/16] 0.0, 128
      %784 = vxpose.xlu0.b32.cont [3/16] 0.0, 128
      %785 = vxpose.xlu0.b32.cont [4/16] 0.0, 128
      %786 = vxpose.xlu0.b32.cont [5/16] 0.0, 128
      %787 = vxpose.xlu0.b32.cont [6/16] 0.0, 128
      %788 = vxpose.xlu0.b32.cont [7/16] 0.0, 128
      %789 = vxpose.xlu0.b32.cont [8/16] 0.0, 128
      %790 = vxpose.xlu0.b32.cont [9/16] 0.0, 128
      %791 = vxpose.xlu0.b32.cont [10/16] 0.0, 128
      %792 = vxpose.xlu0.b32.cont [11/16] 0.0, 128
      %793 = vxpose.xlu0.b32.cont [12/16] 0.0, 128
      %794 = vxpose.xlu0.b32.cont [13/16] 0.0, 128
      %795 = vxpose.xlu0.b32.cont [14/16] 0.0, 128
      %796 = vxpose.xlu0.b32.cont [15/16] 0.0, 128
      %797 = vxpose.xlu0.b32.end [16/16] 0.0, 128
      %v798 = vpop.trf.xlu0
      %v799 = vpop.trf.xlu0
      %v800 = vpop.trf.xlu0
      %v801 = vpop.trf.xlu0
      %v802 = vpop.trf.xlu0
      %v803 = vpop.trf.xlu0
      %v804 = vpop.trf.xlu0
      %v805 = vpop.trf.xlu0
      %v806 = vpop.trf.xlu0
      %v807 = vpop.trf.xlu0
      %v808 = vpop.trf.xlu0
      %v809 = vpop.trf.xlu0
      %v810 = vpop.trf.xlu0
      %v811 = vpop.trf.xlu0
      %v812 = vpop.trf.xlu0
      %v813 = vpop.trf.xlu0
      %v815 = vsel %vm577, %v798, 0
      %v818 = vsel %vm577, %v799, 0
      %820 = vmatpush.msra.mxu0 0.0
      %821 = vmatpush.msra.mxu0 0.0
      %822 = vmatpush.msra.mxu0 0.0
      %823 = vmatpush.msra.mxu0 0.0
      %824 = vmatpush.msra.mxu0 0.0
      %825 = vmatpush.msra.mxu0 0.0
      %826 = vmatpush.msra.mxu0 0.0
      %827 = vmatpush.msra.mxu0 0.0
      %828 = vmatpush.msra.mxu0 0.0
      %829 = vmatpush.msra.mxu0 0.0
      %830 = vmatpush.msra.mxu0 0.0
      %831 = vmatpush.msra.mxu0 0.0
      %832 = vmatpush.msra.mxu0 0.0
      %833 = vmatpush.msra.mxu0 0.0
      %834 = vmatpush.msra.mxu0 0.0
      %835 = vmatpush.msra.mxu0 %v780
      %836 = vmatmul.f32.gmra.mxu0 %v815
      %v837 = vpop.f32.mrf.mxu0
      %v838 = vadd.f32 0.0, %v837
      %839 = vmatmul.f32.gmra.mxu0 %v818
      %v840 = vpop.f32.mrf.mxu0
      %v841 = vadd.f32 0.0, %v840
      %842 = vdwg.mxu0
      %v843 = vmul.f32 %v838, 0.35355338
      %v844 = vmul.f32 %v841, 0.35355338
      %v845 = vsel %vm397, %v843, -inf
      %846 = vmax.xlane.f32.xlu0 %v845
      %v847 = vpop.xlane.xlu0 %846
      %v848 = vsel %vm397, %v844, -inf
      %849 = vmax.xlane.f32.xlu0 %v848
      %v850 = vpop.xlane.xlu0 %849
      %v851 = vsub.f32 %v843, %v847
      %v852 = vsub.f32 %v844, %v850
      %v853 = vmul.f32 %v851, 1.442695
      %v854 = vpow.pop %v853
      %v855 = vmul.f32 %v852, 1.442695
      %v856 = vpow.pop %v855
      %v857 = vsel %vm397, %v854, 0.0
      %858 = vadd.xlane.f32.xlu0 %v857
      %v859 = vpop.xlane.xlu0 %858
      %v860 = vsel %vm397, %v856, 0.0
      %861 = vadd.xlane.f32.xlu0 %v860
      %v862 = vpop.xlane.xlu0 %861
      %v863 = vrcp.pop %v859
      %v864 = vrcp.pop %v862
      %v865 = vmul.f32 %v854, %v863
      %v866 = vmul.f32 %v856, %v864
      %v868 = vsel %vm397, %v781, 0
      %v871 = vsel %vm397, %v865, 0
      %v874 = vsel %vm397, %v866, 0
      %876 = vmatpush.xpose.msra.mxu0 0.0
      %877 = vmatpush.xpose.msra.mxu0 0.0
      %878 = vmatpush.xpose.msra.mxu0 0.0
      %879 = vmatpush.xpose.msra.mxu0 0.0
      %880 = vmatpush.xpose.msra.mxu0 0.0
      %881 = vmatpush.xpose.msra.mxu0 0.0
      %882 = vmatpush.xpose.msra.mxu0 0.0
      %883 = vmatpush.xpose.msra.mxu0 0.0
      %884 = vmatpush.xpose.msra.mxu0 0.0
      %885 = vmatpush.xpose.msra.mxu0 0.0
      %886 = vmatpush.xpose.msra.mxu0 0.0
      %887 = vmatpush.xpose.msra.mxu0 0.0
      %888 = vmatpush.xpose.msra.mxu0 0.0
      %889 = vmatpush.xpose.msra.mxu0 0.0
      %890 = vmatpush.xpose.msra.mxu0 %v874
      %891 = vmatpush.xpose.msra.mxu0 %v871
      %892 = vmatmul.f32.gmra.mxu0 %v868
      %v893 = vpop.f32.mrf.mxu0
      %v894 = vadd.f32 0.0, %v893
      %895 = vdwg.mxu0
      %896 = vst.msk [vmem:[#allocation5 + $0x10] sm:$0xff] %vm397, %v894
      %v897 = vld [vmem:[#allocation2 + $0x18] sm:$0xff]
      %v898 = vld [vmem:[#allocation3 + $0x18] sm:$0xff]
      %v899 = vld [vmem:[#allocation4 + $0x18] sm:$0xff]
      %900 = vxpose.xlu0.b32.start [1/16] %v897, 128
      %901 = vxpose.xlu0.b32.cont [2/16] 0.0, 128
      %902 = vxpose.xlu0.b32.cont [3/16] 0.0, 128
      %903 = vxpose.xlu0.b32.cont [4/16] 0.0, 128
      %904 = vxpose.xlu0.b32.cont [5/16] 0.0, 128
      %905 = vxpose.xlu0.b32.cont [6/16] 0.0, 128
      %906 = vxpose.xlu0.b32.cont [7/16] 0.0, 128
      %907 = vxpose.xlu0.b32.cont [8/16] 0.0, 128
      %908 = vxpose.xlu0.b32.cont [9/16] 0.0, 128
      %909 = vxpose.xlu0.b32.cont [10/16] 0.0, 128
      %910 = vxpose.xlu0.b32.cont [11/16] 0.0, 128
      %911 = vxpose.xlu0.b32.cont [12/16] 0.0, 128
      %912 = vxpose.xlu0.b32.cont [13/16] 0.0, 128
      %913 = vxpose.xlu0.b32.cont [14/16] 0.0, 128
      %914 = vxpose.xlu0.b32.cont [15/16] 0.0, 128
      %915 = vxpose.xlu0.b32.end [16/16] 0.0, 128
      %v916 = vpop.trf.xlu0
      %v917 = vpop.trf.xlu0
      %v918 = vpop.trf.xlu0
      %v919 = vpop.trf.xlu0
      %v920 = vpop.trf.xlu0
      %v921 = vpop.trf.xlu0
      %v922 = vpop.trf.xlu0
      %v923 = vpop.trf.xlu0
      %v924 = vpop.trf.xlu0
      %v925 = vpop.trf.xlu0
      %v926 = vpop.trf.xlu0
      %v927 = vpop.trf.xlu0
      %v928 = vpop.trf.xlu0
      %v929 = vpop.trf.xlu0
      %v930 = vpop.trf.xlu0
      %v931 = vpop.trf.xlu0
      %v933 = vsel %vm577, %v916, 0
      %v936 = vsel %vm577, %v917, 0
      %938 = vmatpush.msra.mxu0 0.0
      %939 = vmatpush.msra.mxu0 0.0
      %940 = vmatpush.msra.mxu0 0.0
      %941 = vmatpush.msra.mxu0 0.0
      %942 = vmatpush.msra.mxu0 0.0
      %943 = vmatpush.msra.mxu0 0.0
      %944 = vmatpush.msra.mxu0 0.0
      %945 = vmatpush.msra.mxu0 0.0
      %946 = vmatpush.msra.mxu0 0.0
      %947 = vmatpush.msra.mxu0 0.0
      %948 = vmatpush.msra.mxu0 0.0
      %949 = vmatpush.msra.mxu0 0.0
      %950 = vmatpush.msra.mxu0 0.0
      %951 = vmatpush.msra.mxu0 0.0
      %952 = vmatpush.msra.mxu0 0.0
      %953 = vmatpush.msra.mxu0 %v898
      %954 = vmatmul.f32.gmra.mxu0 %v933
      %v955 = vpop.f32.mrf.mxu0
      %v956 = vadd.f32 0.0, %v955
      %957 = vmatmul.f32.gmra.mxu0 %v936
      %v958 = vpop.f32.mrf.mxu0
      %v959 = vadd.f32 0.0, %v958
      %960 = vdwg.mxu0
      %v961 = vmul.f32 %v956, 0.35355338
      %v962 = vmul.f32 %v959, 0.35355338
      %v963 = vsel %vm397, %v961, -inf
      %964 = vmax.xlane.f32.xlu0 %v963
      %v965 = vpop.xlane.xlu0 %964
      %v966 = vsel %vm397, %v962, -inf
      %967 = vmax.xlane.f32.xlu0 %v966
      %v968 = vpop.xlane.xlu0 %967
      %v969 = vsub.f32 %v961, %v965
      %v970 = vsub.f32 %v962, %v968
      %v971 = vmul.f32 %v969, 1.442695
      %v972 = vpow.pop %v971
      %v973 = vmul.f32 %v970, 1.442695
      %v974 = vpow.pop %v973
      %v975 = vsel %vm397, %v972, 0.0
      %976 = vadd.xlane.f32.xlu0 %v975
      %v977 = vpop.xlane.xlu0 %976
      %v978 = vsel %vm397, %v974, 0.0
      %979 = vadd.xlane.f32.xlu0 %v978
      %v980 = vpop.xlane.xlu0 %979
      %v981 = vrcp.pop %v977
      %v982 = vrcp.pop %v980
      %v983 = vmul.f32 %v972, %v981
      %v984 = vmul.f32 %v974, %v982
      %v986 = vsel %vm397, %v899, 0
      %v989 = vsel %vm397, %v983, 0
      %v992 = vsel %vm397, %v984, 0
      %994 = vmatpush.xpose.msra.mxu0 0.0
      %995 = vmatpush.xpose.msra.mxu0 0.0
      %996 = vmatpush.xpose.msra.mxu0 0.0
      %997 = vmatpush.xpose.msra.mxu0 0.0
      %998 = vmatpush.xpose.msra.mxu0 0.0
      %999 = vmatpush.xpose.msra.mxu0 0.0
      %1000 = vmatpush.xpose.msra.mxu0 0.0
      %1001 = vmatpush.xpose.msra.mxu0 0.0
      %1002 = vmatpush.xpose.msra.mxu0 0.0
      %1003 = vmatpush.xpose.msra.mxu0 0.0
      %1004 = vmatpush.xpose.msra.mxu0 0.0
      %1005 = vmatpush.xpose.msra.mxu0 0.0
      %1006 = vmatpush.xpose.msra.mxu0 0.0
      %1007 = vmatpush.xpose.msra.mxu0 0.0
      %1008 = vmatpush.xpose.msra.mxu0 %v992
      %1009 = vmatpush.xpose.msra.mxu0 %v989
      %1010 = vmatmul.f32.gmra.mxu0 %v986
      %v1011 = vpop.f32.mrf.mxu0
      %v1012 = vadd.f32 0.0, %v1011
      %1013 = vdwg.mxu0
      %1014 = vst.msk [vmem:[#allocation5 + $0x18] sm:$0xff] %vm397, %v1012
      %v1015 = vld [vmem:[%s5] sm:$0xff]
      %v1016 = vld [vmem:[%s5 + $0x8] sm:$0xff]
      %v1017 = vld [vmem:[%s5 + $0x10] sm:$0xff]
      %v1018 = vld [vmem:[%s5 + $0x18] sm:$0xff]
      %v1019 = vld [vmem:[#allocation5] sm:$0xff]
      %v1020 = vld [vmem:[#allocation5 + $0x8] sm:$0xff]
      %v1021 = vld [vmem:[#allocation5 + $0x10] sm:$0xff]
      %v1022 = vld [vmem:[#allocation5 + $0x18] sm:$0xff]
      %1023 = vset.pattern.permute.xlu0 3
      %1024 = vperm.xlu0 %1023, %v323
      %v1025 = vpop.permute.xlu0 %1024
      %1027 = vset.pattern.permute.xlu0 3
      %1028 = vperm.xlu0 %1027, %v324
      %v1029 = vpop.permute.xlu0 %1028
      %1031 = vset.pattern.permute.xlu0 3
      %1032 = vperm.xlu0 %1031, %v325
      %v1033 = vpop.permute.xlu0 %1032
      %1035 = vset.pattern.permute.xlu0 3
      %1036 = vperm.xlu0 %1035, %v326
      %v1037 = vpop.permute.xlu0 %1036
      %v1040 = vsel %vm355, %v1015, 0
      %v1043 = vsel %vm355, %v1016, 0
      %v1046 = vsel %vm355, %v1017, 0
      %v1049 = vsel %vm355, %v1018, 0
      %1051 = vmatpush.msra.mxu0 0.0
      %1052 = vmatpush.msra.mxu0 0.0
      %1053 = vmatpush.msra.mxu0 0.0
      %1054 = vmatpush.msra.mxu0 0.0
      %1055 = vmatpush.msra.mxu0 0.0
      %1056 = vmatpush.msra.mxu0 0.0
      %1057 = vmatpush.msra.mxu0 0.0
      %1058 = vmatpush.msra.mxu0 0.0
      %1059 = vmatpush.msra.mxu0 0.0
      %1060 = vmatpush.msra.mxu0 0.0
      %1061 = vmatpush.msra.mxu0 0.0
      %1062 = vmatpush.msra.mxu0 0.0
      %1063 = vmatpush.msra.mxu0 %v1022
      %1064 = vmatpush.msra.mxu0 %v1021
      %1065 = vmatpush.msra.mxu0 %v1020
      %1066 = vmatpush.msra.mxu0 %v1019
      %1067 = vmatmul.f32.gmra.mxu0 %v1040
      %v1068 = vpop.f32.mrf.mxu0
      %v1069 = vadd.f32 %v1025, %v1068
      %1070 = vmatmul.f32.gmra.mxu0 %v1043
      %v1071 = vpop.f32.mrf.mxu0
      %v1072 = vadd.f32 %v1029, %v1071
      %1073 = vmatmul.f32.gmra.mxu0 %v1046
      %v1074 = vpop.f32.mrf.mxu0
      %v1075 = vadd.f32 %v1033, %v1074
      %1076 = vmatmul.f32.gmra.mxu0 %v1049
      %v1077 = vpop.f32.mrf.mxu0
      %v1078 = vadd.f32 %v1037, %v1077
      %1079 = vdwg.mxu0
      %1080 = vst.msk [vmem:[%s322] sm:$0xff] %vm397, %v1069
      %1081 = vst.msk [vmem:[%s322 + $0x8] sm:$0xff] %vm397, %v1072
      %1082 = vst.msk [vmem:[%s322 + $0x10] sm:$0xff] %vm397, %v1075
      %1083 = vst.msk [vmem:[%s322 + $0x18] sm:$0xff] %vm397, %v1078
      %p1084 = scmp.lt.s32.totalorder %s21, 1
      %s1085 = scalar_select %p1084, %s21, 1
      %p1086 = scmp.lt.s32.totalorder %s22, 0
      %s1087 = scalar_select %p1086, %s22, 0
      %s1088 = smul.addr %s1085, 4
      %s1089 = sadd.s32 %s1087, %s1088
      %s1090 = smul.addr %s1089, 8
      %s1091 = scalar_lea.vmem %s6, %s1090
      // Predicated region
      $region45: #{tpu_custom_call.1} parent=43 // pred_check
        %p1092 = pneg %p192
      $region46: #{tpu_custom_call.1} parent=43 // pred_check_branch
        %1094 = sbr.rel (%p1092) target = $region48
      $region47: #{tpu_custom_call.1} parent=43 // pred_region
        _
      $region48: #{tpu_custom_call.1} parent=43 // pred_fallthru
        _
    $region44: #{tpu_custom_call.1} parent=5 // pred_fallthru
      _
    %p1095 = scmp.le.s32.totalorder 2, %s12
    // Predicated region
    $region49: #{tpu_custom_call.1} parent=5 // pred_check
      %p1096 = pneg %p1095
    $region50: #{tpu_custom_call.1} parent=5 // pred_check_branch
      %1098 = sbr.rel (%p1096) target = $region52
    $region51: #{tpu_custom_call.1} parent=5 // pred_region
      %s1099 = ssub.s32 %s12, 2
      // Predicated region
      $region53: #{tpu_custom_call.1} parent=51 // pred_check
        %p1100 = pneg %p198
      $region54: #{tpu_custom_call.1} parent=51 // pred_check_branch
        %1102 = sbr.rel (%p1100) target = $region56
      $region55: #{tpu_custom_call.1} parent=51 // pred_region
        %p1103 = scmp.lt.s32.totalorder %s23, 1
        %s1104 = scalar_select %p1103, %s23, 1
        %p1105 = scmp.lt.s32.totalorder %s24, 0
        %s1106 = scalar_select %p1105, %s24, 0
        %s1107 = smul.addr %s1104, 4
        %s1108 = sadd.s32 %s1106, %s1107
        %s1109 = smul.addr %s1108, 8
        %s1110 = scalar_lea.vmem %s6, %s1109
      $region56: #{tpu_custom_call.1} parent=51 // pred_fallthru
        _
    $region52: #{tpu_custom_call.1} parent=5 // pred_fallthru
      _
  $region6: #{tpu_custom_call.1} parent=0 // loop_footer
    %s16 = sadd.s32 1, %s12
  $region7: #{tpu_custom_call.1} parent=0 // loop_footer_branch
    %11 = sbr.rel target = $region3
  $region8: #{tpu_custom_call.1} parent=0 // loop_exit
    _

</llo_original>
